<compile_context>
chip_gen: v5e
topology: v5e:2x2
jax: 0.10.0
libtpu: 0.0.40
codegen_flags: <defaults>
</compile_context>

<pallas_src>
import functools

import jax
import jax.numpy as jnp
from jax import lax
from jax.experimental import pallas as pl
from jax.experimental.pallas import tpu as pltpu

# --- synthetic config (mirrors cfg.MODEL.ROI_DENSEPOSE_HEAD.CSE.*) -----------
EMBED_SIZE = 32                 # D
HEATMAP_SIZE = 16               # S
NUM_PIXELS_TO_SAMPLE = 64       # P
NUM_VERTICES = 128              # V (synthetic mesh size)
TEMP_PIX_TO_VERTEX = 0.05
TEMP_VERTEX_TO_PIX = 0.05
NORM_P = 2                      # torch.norm(..., p=2) over the flattened matrix
EPS = 1e-6                      # normalize_embeddings clamp epsilon
# PIXEL_SIGMA is unused in the PyTorch forward; kept out intentionally.


# --- glue: pixel distance matrix (same as _create_pixel_dist_matrix) ---------
def create_pixel_dist_matrix(grid_size: int) -> jnp.ndarray:
    rows = jnp.arange(grid_size)
    cols = jnp.arange(grid_size)
    rr, cc = jnp.meshgrid(rows, cols, indexing="ij")  # torch.meshgrid default = 'ij'
    coords = jnp.stack([rr, cc], axis=-1).reshape(grid_size * grid_size, 2)
    coords = coords.astype(jnp.float32)
    diff = coords[:, None, :] - coords[None, :, :]
    return jnp.sum(diff * diff, axis=-1)  # squared euclidean distance matrix


# --- glue: foreground pixel sampling (mirrors _sample_fg_pixels_randperm) ----
def sample_fg_pixels(fg_mask: jnp.ndarray, sample_size: int, key) -> jnp.ndarray:
    flat = fg_mask.reshape(-1)
    fg_idx = jnp.nonzero(flat)[0]  # eager (outside jit), dynamic size OK
    num_pixels = int(fg_idx.shape[0])
    if sample_size <= 0 or num_pixels <= sample_size:
        return fg_idx
    perm = jax.random.permutation(key, num_pixels)[:sample_size]
    return fg_idx[perm]


# --- EUP reciprocal (approx) + one Newton-Raphson step => ~f32 exact ----------
def _recip(x):
    r = pl.reciprocal(x, approx=True)   # EUP slot (free-ish), ~half precision
    return r * (2.0 - x * r)            # one NR step restores full f32 accuracy


# --- Pallas kernel: all (instance, mesh) pairs in one launch ------------------
def _cycle_loss_kernel(pix_ref, vert_ref, dist_ref, out_ref, *,
                       npairs, num_pix, inv_t_pv, inv_t_vp):
    pix = pix_ref[...].astype(jnp.float32)     # (npairs*P, D) sampled pixel embeddings
    vert = vert_ref[...].astype(jnp.float32)   # (V, D) mesh vertex embeddings (L2-normalized)

    # normalize_embeddings: row-wise L2 normalize with clamp(min=EPS) on the norm
    sq = jnp.sum(pix * pix, axis=1, keepdims=True)
    inv_norm = _recip(jnp.maximum(jnp.sqrt(sq), EPS))
    pix_n = pix * inv_norm                                        # (npairs*P, D)

    # sim = pix_n @ vert.T, done as dot_general contracting dim 1 of both operands:
    # one batched MXU matmul (M = npairs*P = 128), no XLU transpose, lanes = V = 128.
    sim = lax.dot_general(pix_n, vert, (((1,), (1,)), ((), ())),
                          preferred_element_type=jnp.float32)     # (npairs*P, V)

    # c_pix_vertex = softmax over vertices (axis=1); rows are independent, so this
    # is safely batched across pairs.
    a = sim * inv_t_pv
    a = a - jnp.max(a, axis=1, keepdims=True)
    ea = jnp.exp(a)
    c_pv = ea * _recip(jnp.sum(ea, axis=1, keepdims=True))        # (npairs*P, V)

    b_all = sim * inv_t_vp

    # Per pair: vertex->pixel softmax kept in (P, V) layout (softmax over axis 0,
    # i.e. over that pair's pixels — s_vp[p, v] == c_vertex_pix[v, p]), then the
    # (P, P) cycle matmul contracting V on both operands (again no transpose).
    loss_sum = jnp.float32(0.0)
    for i in range(npairs):                 # npairs is tiny & static -> unrolled
        lo, hi = i * num_pix, (i + 1) * num_pix
        b_i = b_all[lo:hi, :]                                     # (P, V)
        b_i = b_i - jnp.max(b_i, axis=0, keepdims=True)
        eb = jnp.exp(b_i)
        s_vp = eb * _recip(jnp.sum(eb, axis=0, keepdims=True))    # (P, V)

        # c_cycle[p, q] = sum_v c_pv[p, v] * s_vp[q, v]
        c_cycle = lax.dot_general(c_pv[lo:hi, :], s_vp, (((1,), (1,)), ((), ())),
                                  preferred_element_type=jnp.float32)  # (P, P)

        w = dist_ref[i].astype(jnp.float32) * c_cycle
        loss_sum = loss_sum + jnp.sqrt(jnp.sum(w * w))            # Frobenius norm (NORM_P == 2)

    # torch.stack(losses).mean() reduced in-kernel; single scalar SMEM store.
    out_ref[0, 0] = loss_sum * (1.0 / npairs)


# --- wrapper ------------------------------------------------------------------
def pix_to_shape_cycle_loss(pix_b, mesh_vertex_embeddings, dist_b):
    """pix_b: (NPAIRS, P, D) sampled pixel embeddings
       mesh_vertex_embeddings: (V, D) shared across pairs
       dist_b: (NPAIRS, P, P) squared pixel-distance submatrices"""
    npairs, num_pix, d = pix_b.shape
    if npairs == 0:
        # torch: return pix_embeds.sum() * 0 (value-equivalent forward fallback)
        return jnp.zeros((), jnp.float32)

    pix_flat = pix_b.reshape(npairs * num_pix, d)   # batch pairs into the MXU M dim

    kernel = functools.partial(
        _cycle_loss_kernel,
        npairs=npairs, num_pix=num_pix,
        inv_t_pv=float(1.0 / TEMP_PIX_TO_VERTEX),
        inv_t_vp=float(1.0 / TEMP_VERTEX_TO_PIX),
    )
    out = pl.pallas_call(
        kernel,
        out_shape=jax.ShapeDtypeStruct((1, 1), jnp.float32),
        in_specs=[
            pl.BlockSpec(memory_space=pltpu.MemorySpace.VMEM),   # pix_flat (whole array)
            pl.BlockSpec(memory_space=pltpu.MemorySpace.VMEM),   # shared vertex embeddings
            pl.BlockSpec(memory_space=pltpu.MemorySpace.VMEM),   # pixel distance blocks
        ],
        out_specs=pl.BlockSpec(memory_space=pltpu.MemorySpace.SMEM),  # scalar loss
    )(pix_flat, mesh_vertex_embeddings, dist_b)
    return out[0, 0]


# --- pure-JAX reference for correctness check ----------------------------------
def reference_loss(pix_b, vert, dist_b):
    losses = []
    for pix, dists in zip(pix_b, dist_b):
        nrm = jnp.clip(jnp.linalg.norm(pix, axis=1, keepdims=True), EPS, None)
        pix_n = pix / nrm
        sim = pix_n @ vert.T
        c_pv = jax.nn.softmax(sim / TEMP_PIX_TO_VERTEX, axis=1)
        c_vp = jax.nn.softmax(sim.T / TEMP_VERTEX_TO_PIX, axis=1)
        c_cycle = c_pv @ c_vp
        losses.append(jnp.linalg.norm(dists * c_cycle))
    return jnp.mean(jnp.stack(losses))


if __name__ == "__main__":
    key = jax.random.PRNGKey(0)
    N, S, D, P, V = 2, HEATMAP_SIZE, EMBED_SIZE, NUM_PIXELS_TO_SAMPLE, NUM_VERTICES
    k1, k2, k3, k4 = jax.random.split(key, 4)

    # densepose_predictor_outputs.embedding: NCHW [N, D, S, S]
    pix_embeds = jax.random.normal(k1, (N, D, S, S), dtype=jnp.float32)
    # GT foreground masks (masks_gt.long() in torch); ~70% foreground so >= P fg pixels
    masks_gt = (jax.random.uniform(k2, (N, S, S)) > 0.3).astype(jnp.int32)
    # deterministic "embedder" output: L2-normalized vertex embeddings [V, D]
    mesh_vertex_embeddings = jax.random.normal(k3, (V, D), dtype=jnp.float32)
    mesh_vertex_embeddings = mesh_vertex_embeddings / jnp.clip(
        jnp.linalg.norm(mesh_vertex_embeddings, axis=1, keepdims=True), EPS, None
    )

    pixel_dists_full = create_pixel_dist_matrix(S)  # (S*S, S*S)

    # TODO(synk): extract_data_for_mask_loss_from_matches / MeshCatalog / embedder
    # lookup are detection-pipeline glue with no Pallas equivalent; masks and the
    # mesh list are synthetic.
    mesh_names = ["synthetic_mesh"]

    # glue: per-(instance, mesh) sampling + gathers (data-dependent, dynamic-size)
    pix_list, dist_list = [], []
    samp_key = k4
    for i in range(N):
        for _ in mesh_names:
            samp_key, sk = jax.random.split(samp_key)
            idx = sample_fg_pixels(masks_gt[i], P, sk)
            assert idx.shape[0] == P, "synthetic mask must have >= P foreground pixels"
            emb_flat = pix_embeds[i].reshape(D, S * S)        # (D, S*S)
            pix_list.append(emb_flat[:, idx].T)               # (P, D)
            dist_list.append(pixel_dists_full[idx][:, idx])   # (P, P)

    pix_b = jnp.stack(pix_list)    # (NPAIRS, P, D)
    dist_b = jnp.stack(dist_list)  # (NPAIRS, P, P)

    loss = pix_to_shape_cycle_loss(pix_b, mesh_vertex_embeddings, dist_b)
    loss = jax.block_until_ready(loss)

    ref = reference_loss(pix_b, mesh_vertex_embeddings, dist_b)
    assert jnp.allclose(loss, ref, rtol=3e-4, atol=1e-5), (float(loss), float(ref))
    print("KERNEL_OK")
</pallas_src>

<mosaic_0001>
module attributes {stable_mosaic.version = 11 : i64} {
  func.func @_cycle_loss_kernel(%arg0: memref<128x32xf32, #tpu.memory_space<vmem>>, %arg1: memref<128x32xf32, #tpu.memory_space<vmem>>, %arg2: memref<2x64x64xf32, #tpu.memory_space<vmem>>, %arg3: memref<1x1xf32, #tpu.memory_space<smem>>) attributes {dimension_semantics = [], scalar_prefetch = 0 : i64, scratch_operands = 0 : i64, tpu.core_type = #tpu.core_type<tc>} {
    %c0 = arith.constant 0 : index
    %c0_0 = arith.constant 0 : index
    %0 = vector.load %arg0[%c0, %c0_0] : memref<128x32xf32, #tpu.memory_space<vmem>>, vector<128x32xf32>
    %c0_1 = arith.constant 0 : index
    %c0_2 = arith.constant 0 : index
    %1 = vector.load %arg1[%c0_1, %c0_2] : memref<128x32xf32, #tpu.memory_space<vmem>>, vector<128x32xf32>
    %2 = arith.mulf %0, %0 : vector<128x32xf32>
    %cst = arith.constant dense<0.000000e+00> : vector<128xf32>
    %3 = vector.multi_reduction <add>, %2, %cst [1] : vector<128x32xf32> to vector<128xf32>
    %4 = vector.shape_cast %3 : vector<128xf32> to vector<128x1xf32>
    %5 = math.sqrt %4 : vector<128x1xf32>
    %cst_3 = arith.constant 9.99999997E-7 : f32
    %6 = vector.broadcast %cst_3 : f32 to vector<128x1xf32>
    %7 = arith.maximumf %5, %6 : vector<128x1xf32>
    %8 = tpu.reciprocal %7 {approx = true} : vector<128x1xf32> -> vector<128x1xf32>
    %9 = arith.mulf %7, %8 : vector<128x1xf32>
    %cst_4 = arith.constant 2.000000e+00 : f32
    %10 = vector.broadcast %cst_4 : f32 to vector<128x1xf32>
    %11 = arith.subf %10, %9 : vector<128x1xf32>
    %12 = arith.mulf %8, %11 : vector<128x1xf32>
    %13 = vector.broadcast %12 : vector<128x1xf32> to vector<128x32xf32>
    %14 = arith.mulf %0, %13 : vector<128x32xf32>
    %cst_5 = arith.constant dense<0.000000e+00> : vector<128x128xf32>
    %15 = tpu.matmul %14, %1, %cst_5 {dimension_numbers = #tpu.dot_dimension_numbers<[1], [1], [0], [0], [0, 0, 1, 0], [], []>} : vector<128x32xf32>, vector<128x32xf32>, vector<128x128xf32> -> vector<128x128xf32>
    %cst_6 = arith.constant 2.000000e+01 : f32
    %16 = vector.broadcast %cst_6 : f32 to vector<128x128xf32>
    %17 = arith.mulf %15, %16 : vector<128x128xf32>
    %cst_7 = arith.constant dense<0xFF800000> : vector<128xf32>
    %18 = vector.multi_reduction <maximumf>, %17, %cst_7 [1] : vector<128x128xf32> to vector<128xf32>
    %19 = vector.shape_cast %18 : vector<128xf32> to vector<128x1xf32>
    %20 = vector.broadcast %19 : vector<128x1xf32> to vector<128x128xf32>
    %21 = arith.subf %17, %20 : vector<128x128xf32>
    %22 = math.exp %21 : vector<128x128xf32>
    %cst_8 = arith.constant dense<0.000000e+00> : vector<128xf32>
    %23 = vector.multi_reduction <add>, %22, %cst_8 [1] : vector<128x128xf32> to vector<128xf32>
    %24 = vector.shape_cast %23 : vector<128xf32> to vector<128x1xf32>
    %25 = tpu.reciprocal %24 {approx = true} : vector<128x1xf32> -> vector<128x1xf32>
    %26 = arith.mulf %24, %25 : vector<128x1xf32>
    %cst_9 = arith.constant 2.000000e+00 : f32
    %27 = vector.broadcast %cst_9 : f32 to vector<128x1xf32>
    %28 = arith.subf %27, %26 : vector<128x1xf32>
    %29 = arith.mulf %25, %28 : vector<128x1xf32>
    %30 = vector.broadcast %29 : vector<128x1xf32> to vector<128x128xf32>
    %31 = arith.mulf %22, %30 : vector<128x128xf32>
    %cst_10 = arith.constant 2.000000e+01 : f32
    %32 = vector.broadcast %cst_10 : f32 to vector<128x128xf32>
    %33 = arith.mulf %15, %32 : vector<128x128xf32>
    %34 = vector.extract_strided_slice %33 {offsets = [0, 0], sizes = [64, 128], strides = [1, 1]} : vector<128x128xf32> to vector<64x128xf32>
    %cst_11 = arith.constant dense<0xFF800000> : vector<128xf32>
    %35 = vector.multi_reduction <maximumf>, %34, %cst_11 [0] : vector<64x128xf32> to vector<128xf32>
    %36 = vector.shape_cast %35 : vector<128xf32> to vector<1x128xf32>
    %37 = vector.broadcast %36 : vector<1x128xf32> to vector<64x128xf32>
    %38 = arith.subf %34, %37 : vector<64x128xf32>
    %39 = math.exp %38 : vector<64x128xf32>
    %cst_12 = arith.constant dense<0.000000e+00> : vector<128xf32>
    %40 = vector.multi_reduction <add>, %39, %cst_12 [0] : vector<64x128xf32> to vector<128xf32>
    %41 = vector.shape_cast %40 : vector<128xf32> to vector<1x128xf32>
    %42 = tpu.reciprocal %41 {approx = true} : vector<1x128xf32> -> vector<1x128xf32>
    %43 = arith.mulf %41, %42 : vector<1x128xf32>
    %cst_13 = arith.constant 2.000000e+00 : f32
    %44 = vector.broadcast %cst_13 : f32 to vector<1x128xf32>
    %45 = arith.subf %44, %43 : vector<1x128xf32>
    %46 = arith.mulf %42, %45 : vector<1x128xf32>
    %47 = vector.broadcast %46 : vector<1x128xf32> to vector<64x128xf32>
    %48 = arith.mulf %39, %47 : vector<64x128xf32>
    %49 = vector.extract_strided_slice %31 {offsets = [0, 0], sizes = [64, 128], strides = [1, 1]} : vector<128x128xf32> to vector<64x128xf32>
    %cst_14 = arith.constant dense<0.000000e+00> : vector<64x64xf32>
    %50 = tpu.matmul %49, %48, %cst_14 {dimension_numbers = #tpu.dot_dimension_numbers<[1], [1], [0], [0], [0, 0, 1, 0], [], []>} : vector<64x128xf32>, vector<64x128xf32>, vector<64x64xf32> -> vector<64x64xf32>
    %c0_15 = arith.constant 0 : index
    %c0_16 = arith.constant 0 : index
    %c0_17 = arith.constant 0 : index
    %51 = vector.load %arg2[%c0_15, %c0_16, %c0_17] : memref<2x64x64xf32, #tpu.memory_space<vmem>>, vector<1x64x64xf32>
    %52 = vector.shape_cast %51 : vector<1x64x64xf32> to vector<64x64xf32>
    %53 = arith.mulf %52, %50 : vector<64x64xf32>
    %54 = arith.mulf %53, %53 : vector<64x64xf32>
    %55 = vector.shape_cast %54 : vector<64x64xf32> to vector<1x64x64xf32>
    %cst_18 = arith.constant dense<0.000000e+00> : vector<1xf32>
    %56 = vector.multi_reduction <add>, %55, %cst_18 [1, 2] : vector<1x64x64xf32> to vector<1xf32>
    %57 = vector.shape_cast %56 : vector<1xf32> to vector<1x1x1xf32>
    %58 = vector.extract %57[0, 0, 0] : f32 from vector<1x1x1xf32>
    %59 = math.sqrt %58 : f32
    %cst_19 = arith.constant 0.000000e+00 : f32
    %60 = arith.addf %cst_19, %59 : f32
    %61 = vector.extract_strided_slice %33 {offsets = [64, 0], sizes = [64, 128], strides = [1, 1]} : vector<128x128xf32> to vector<64x128xf32>
    %cst_20 = arith.constant dense<0xFF800000> : vector<128xf32>
    %62 = vector.multi_reduction <maximumf>, %61, %cst_20 [0] : vector<64x128xf32> to vector<128xf32>
    %63 = vector.shape_cast %62 : vector<128xf32> to vector<1x128xf32>
    %64 = vector.broadcast %63 : vector<1x128xf32> to vector<64x128xf32>
    %65 = arith.subf %61, %64 : vector<64x128xf32>
    %66 = math.exp %65 : vector<64x128xf32>
    %cst_21 = arith.constant dense<0.000000e+00> : vector<128xf32>
    %67 = vector.multi_reduction <add>, %66, %cst_21 [0] : vector<64x128xf32> to vector<128xf32>
    %68 = vector.shape_cast %67 : vector<128xf32> to vector<1x128xf32>
    %69 = tpu.reciprocal %68 {approx = true} : vector<1x128xf32> -> vector<1x128xf32>
    %70 = arith.mulf %68, %69 : vector<1x128xf32>
    %cst_22 = arith.constant 2.000000e+00 : f32
    %71 = vector.broadcast %cst_22 : f32 to vector<1x128xf32>
    %72 = arith.subf %71, %70 : vector<1x128xf32>
    %73 = arith.mulf %69, %72 : vector<1x128xf32>
    %74 = vector.broadcast %73 : vector<1x128xf32> to vector<64x128xf32>
    %75 = arith.mulf %66, %74 : vector<64x128xf32>
    %76 = vector.extract_strided_slice %31 {offsets = [64, 0], sizes = [64, 128], strides = [1, 1]} : vector<128x128xf32> to vector<64x128xf32>
    %cst_23 = arith.constant dense<0.000000e+00> : vector<64x64xf32>
    %77 = tpu.matmul %76, %75, %cst_23 {dimension_numbers = #tpu.dot_dimension_numbers<[1], [1], [0], [0], [0, 0, 1, 0], [], []>} : vector<64x128xf32>, vector<64x128xf32>, vector<64x64xf32> -> vector<64x64xf32>
    %c1 = arith.constant 1 : index
    %c0_24 = arith.constant 0 : index
    %c0_25 = arith.constant 0 : index
    %78 = vector.load %arg2[%c1, %c0_24, %c0_25] : memref<2x64x64xf32, #tpu.memory_space<vmem>>, vector<1x64x64xf32>
    %79 = vector.shape_cast %78 : vector<1x64x64xf32> to vector<64x64xf32>
    %80 = arith.mulf %79, %77 : vector<64x64xf32>
    %81 = arith.mulf %80, %80 : vector<64x64xf32>
    %82 = vector.shape_cast %81 : vector<64x64xf32> to vector<1x64x64xf32>
    %cst_26 = arith.constant dense<0.000000e+00> : vector<1xf32>
    %83 = vector.multi_reduction <add>, %82, %cst_26 [1, 2] : vector<1x64x64xf32> to vector<1xf32>
    %84 = vector.shape_cast %83 : vector<1xf32> to vector<1x1x1xf32>
    %85 = vector.extract %84[0, 0, 0] : f32 from vector<1x1x1xf32>
    %86 = math.sqrt %85 : f32
    %87 = arith.addf %60, %86 : f32
    %cst_27 = arith.constant 5.000000e-01 : f32
    %88 = arith.mulf %87, %cst_27 : f32
    %c0_28 = arith.constant 0 : index
    %c0_29 = arith.constant 0 : index
    %89 = memref.load %arg3[%c0_28, %c0_29] : memref<1x1xf32, #tpu.memory_space<smem>>
    memref.store %88, %arg3[%c0_28, %c0_29] : memref<1x1xf32, #tpu.memory_space<smem>>
    return
  }
}

</mosaic_0001>

<llo_original>
// kernel: tpu_custom_call.1
$region0: #{tpu_custom_call.1}
  #allocation0 [shape = 'u32[]', space=smem, size = 0x4, offset = 0x4, fixed_abs, tag = 'smem constant byte address 0x4 - core index']
  #allocation1 [shape = 'u32[72,128]{1,0:T(1,128)}', space=vmem, size = 0x9000, scoped, tag = 'internal scratch']
  %s0 = inlined_call_operand.vmem [shape: f32[128,32], index: 0, kind: input, shape index: {}]
  %s1 = inlined_call_operand.vmem [shape: f32[128,32], index: 1, kind: input, shape index: {}]
  %s2 = inlined_call_operand.vmem [shape: f32[2,64,64], index: 2, kind: input, shape index: {}]
  %s3 = inlined_call_operand.hbm [shape: f32[1,1], index: 3, kind: output, shape index: {}]
  %s4 = sld [smem:[#allocation0]]
  $region22: #{tpu_custom_call.1} parent=0
    _
  %s6 = ssub.s32 1, %s4
  %s7 = scalar_select 0, %s6, %s4
  $region1: #{tpu_custom_call.1} parent=0
    #allocation2 [shape = 'u8[512]{0}', space=smem, size = 0x200, scoped, tag = 'output window, operand 0, single buffered']
    #allocation3 [shape = 's32[1]{0}', space=sflag, size = 0x4, scoped, tag = 'scoped memory for tpu_custom_call.1']
    %8 = vsyncpa [#allocation3], 0
    // Predicated region
    $region2: #{tpu_custom_call.1} parent=1 // pred_check
      _
    $region3: #{tpu_custom_call.1} parent=1 // pred_check_branch
      %10 = sbr.rel (0) target = $region5
    $region4: #{tpu_custom_call.1} parent=1 // pred_region
      _
    $region5: #{tpu_custom_call.1} parent=1 // pred_fallthru
      _
    // Predicated region
    $region6: #{tpu_custom_call.1} parent=1 // pred_check
      _
    $region7: #{tpu_custom_call.1} parent=1 // pred_check_branch
      %12 = sbr.rel (0) target = $region9
    $region8: #{tpu_custom_call.1} parent=1 // pred_region
      _
    $region9: #{tpu_custom_call.1} parent=1 // pred_fallthru
      _
    // Predicated region
    $region10: #{tpu_custom_call.1} parent=1 // pred_check
      _
    $region11: #{tpu_custom_call.1} parent=1 // pred_check_branch
      %14 = sbr.rel (0) target = $region13
    $region12: #{tpu_custom_call.1} parent=1 // pred_region
      _
    $region13: #{tpu_custom_call.1} parent=1 // pred_fallthru
      _
    %v15 = vld [vmem:[%s0] sm:$0xff]
    %v16 = vld [vmem:[%s0 + $0x8] sm:$0xff]
    %v17 = vld [vmem:[%s0 + $0x10] sm:$0xff]
    %v18 = vld [vmem:[%s0 + $0x18] sm:$0xff]
    %v19 = vld [vmem:[%s0 + $0x20] sm:$0xff]
    %v20 = vld [vmem:[%s0 + $0x28] sm:$0xff]
    %v21 = vld [vmem:[%s0 + $0x30] sm:$0xff]
    %v22 = vld [vmem:[%s0 + $0x38] sm:$0xff]
    %v23 = vld [vmem:[%s0 + $0x40] sm:$0xff]
    %v24 = vld [vmem:[%s0 + $0x48] sm:$0xff]
    %v25 = vld [vmem:[%s0 + $0x50] sm:$0xff]
    %v26 = vld [vmem:[%s0 + $0x58] sm:$0xff]
    %v27 = vld [vmem:[%s0 + $0x60] sm:$0xff]
    %v28 = vld [vmem:[%s0 + $0x68] sm:$0xff]
    %v29 = vld [vmem:[%s0 + $0x70] sm:$0xff]
    %v30 = vld [vmem:[%s0 + $0x78] sm:$0xff]
    %v31 = vld [vmem:[%s1] sm:$0xff]
    %v32 = vld [vmem:[%s1 + $0x8] sm:$0xff]
    %v33 = vld [vmem:[%s1 + $0x10] sm:$0xff]
    %v34 = vld [vmem:[%s1 + $0x18] sm:$0xff]
    %v35 = vld [vmem:[%s1 + $0x20] sm:$0xff]
    %v36 = vld [vmem:[%s1 + $0x28] sm:$0xff]
    %v37 = vld [vmem:[%s1 + $0x30] sm:$0xff]
    %v38 = vld [vmem:[%s1 + $0x38] sm:$0xff]
    %v39 = vld [vmem:[%s1 + $0x40] sm:$0xff]
    %v40 = vld [vmem:[%s1 + $0x48] sm:$0xff]
    %v41 = vld [vmem:[%s1 + $0x50] sm:$0xff]
    %v42 = vld [vmem:[%s1 + $0x58] sm:$0xff]
    %v43 = vld [vmem:[%s1 + $0x60] sm:$0xff]
    %v44 = vld [vmem:[%s1 + $0x68] sm:$0xff]
    %v45 = vld [vmem:[%s1 + $0x70] sm:$0xff]
    %v46 = vld [vmem:[%s1 + $0x78] sm:$0xff]
    %v47 = vmul.f32 %v15, %v15
    %v48 = vmul.f32 %v16, %v16
    %v49 = vmul.f32 %v17, %v17
    %v50 = vmul.f32 %v18, %v18
    %v51 = vmul.f32 %v19, %v19
    %v52 = vmul.f32 %v20, %v20
    %v53 = vmul.f32 %v21, %v21
    %v54 = vmul.f32 %v22, %v22
    %v55 = vmul.f32 %v23, %v23
    %v56 = vmul.f32 %v24, %v24
    %v57 = vmul.f32 %v25, %v25
    %v58 = vmul.f32 %v26, %v26
    %v59 = vmul.f32 %v27, %v27
    %v60 = vmul.f32 %v28, %v28
    %v61 = vmul.f32 %v29, %v29
    %v62 = vmul.f32 %v30, %v30
    %vm63 = vcmask 261120
    %v64 = vsel %vm63, %v47, 0.0
    %65 = vadd.xlane.f32.xlu0 %v64
    %v66 = vpop.xlane.xlu0 %65
    %v67 = vsel %vm63, %v48, 0.0
    %68 = vadd.xlane.f32.xlu0 %v67
    %v69 = vpop.xlane.xlu0 %68
    %v70 = vsel %vm63, %v49, 0.0
    %71 = vadd.xlane.f32.xlu0 %v70
    %v72 = vpop.xlane.xlu0 %71
    %v73 = vsel %vm63, %v50, 0.0
    %74 = vadd.xlane.f32.xlu0 %v73
    %v75 = vpop.xlane.xlu0 %74
    %v76 = vsel %vm63, %v51, 0.0
    %77 = vadd.xlane.f32.xlu0 %v76
    %v78 = vpop.xlane.xlu0 %77
    %v79 = vsel %vm63, %v52, 0.0
    %80 = vadd.xlane.f32.xlu0 %v79
    %v81 = vpop.xlane.xlu0 %80
    %v82 = vsel %vm63, %v53, 0.0
    %83 = vadd.xlane.f32.xlu0 %v82
    %v84 = vpop.xlane.xlu0 %83
    %v85 = vsel %vm63, %v54, 0.0
    %86 = vadd.xlane.f32.xlu0 %v85
    %v87 = vpop.xlane.xlu0 %86
    %v88 = vsel %vm63, %v55, 0.0
    %89 = vadd.xlane.f32.xlu0 %v88
    %v90 = vpop.xlane.xlu0 %89
    %v91 = vsel %vm63, %v56, 0.0
    %92 = vadd.xlane.f32.xlu0 %v91
    %v93 = vpop.xlane.xlu0 %92
    %v94 = vsel %vm63, %v57, 0.0
    %95 = vadd.xlane.f32.xlu0 %v94
    %v96 = vpop.xlane.xlu0 %95
    %v97 = vsel %vm63, %v58, 0.0
    %98 = vadd.xlane.f32.xlu0 %v97
    %v99 = vpop.xlane.xlu0 %98
    %v100 = vsel %vm63, %v59, 0.0
    %101 = vadd.xlane.f32.xlu0 %v100
    %v102 = vpop.xlane.xlu0 %101
    %v103 = vsel %vm63, %v60, 0.0
    %104 = vadd.xlane.f32.xlu0 %v103
    %v105 = vpop.xlane.xlu0 %104
    %v106 = vsel %vm63, %v61, 0.0
    %107 = vadd.xlane.f32.xlu0 %v106
    %v108 = vpop.xlane.xlu0 %107
    %v109 = vsel %vm63, %v62, 0.0
    %110 = vadd.xlane.f32.xlu0 %v109
    %v111 = vpop.xlane.xlu0 %110
    %v112 = vrsqrt.pop %v66
    %v113 = vmul.f32 %v112, %v66
    %v114 = vmul.f32 %v113, %v112
    %v115 = vmul.f32 0.5, %v114
    %v116 = vsub.f32 1.5, %v115
    %v117 = vmul.f32 %v112, %v116
    %v118 = vmul.f32 %v66, %v117
    %vm119 = vcmp.eq.f32.partialorder %v66, inf
    %v120 = vsel %vm119, %v66, %v118
    %vm121 = vcmp.eq.f32.partialorder %v66, 0.0
    %v122 = vand.u32 %v66, 2147483648
    %v123 = vsel %vm121, %v122, %v120
    %v124 = vrsqrt.pop %v69
    %v125 = vmul.f32 %v124, %v69
    %v126 = vmul.f32 %v125, %v124
    %v127 = vmul.f32 0.5, %v126
    %v128 = vsub.f32 1.5, %v127
    %v129 = vmul.f32 %v124, %v128
    %v130 = vmul.f32 %v69, %v129
    %vm131 = vcmp.eq.f32.partialorder %v69, inf
    %v132 = vsel %vm131, %v69, %v130
    %vm133 = vcmp.eq.f32.partialorder %v69, 0.0
    %v134 = vand.u32 %v69, 2147483648
    %v135 = vsel %vm133, %v134, %v132
    %v136 = vrsqrt.pop %v72
    %v137 = vmul.f32 %v136, %v72
    %v138 = vmul.f32 %v137, %v136
    %v139 = vmul.f32 0.5, %v138
    %v140 = vsub.f32 1.5, %v139
    %v141 = vmul.f32 %v136, %v140
    %v142 = vmul.f32 %v72, %v141
    %vm143 = vcmp.eq.f32.partialorder %v72, inf
    %v144 = vsel %vm143, %v72, %v142
    %vm145 = vcmp.eq.f32.partialorder %v72, 0.0
    %v146 = vand.u32 %v72, 2147483648
    %v147 = vsel %vm145, %v146, %v144
    %v148 = vrsqrt.pop %v75
    %v149 = vmul.f32 %v148, %v75
    %v150 = vmul.f32 %v149, %v148
    %v151 = vmul.f32 0.5, %v150
    %v152 = vsub.f32 1.5, %v151
    %v153 = vmul.f32 %v148, %v152
    %v154 = vmul.f32 %v75, %v153
    %vm155 = vcmp.eq.f32.partialorder %v75, inf
    %v156 = vsel %vm155, %v75, %v154
    %vm157 = vcmp.eq.f32.partialorder %v75, 0.0
    %v158 = vand.u32 %v75, 2147483648
    %v159 = vsel %vm157, %v158, %v156
    %v160 = vrsqrt.pop %v78
    %v161 = vmul.f32 %v160, %v78
    %v162 = vmul.f32 %v161, %v160
    %v163 = vmul.f32 0.5, %v162
    %v164 = vsub.f32 1.5, %v163
    %v165 = vmul.f32 %v160, %v164
    %v166 = vmul.f32 %v78, %v165
    %vm167 = vcmp.eq.f32.partialorder %v78, inf
    %v168 = vsel %vm167, %v78, %v166
    %vm169 = vcmp.eq.f32.partialorder %v78, 0.0
    %v170 = vand.u32 %v78, 2147483648
    %v171 = vsel %vm169, %v170, %v168
    %v172 = vrsqrt.pop %v81
    %v173 = vmul.f32 %v172, %v81
    %v174 = vmul.f32 %v173, %v172
    %v175 = vmul.f32 0.5, %v174
    %v176 = vsub.f32 1.5, %v175
    %v177 = vmul.f32 %v172, %v176
    %v178 = vmul.f32 %v81, %v177
    %vm179 = vcmp.eq.f32.partialorder %v81, inf
    %v180 = vsel %vm179, %v81, %v178
    %vm181 = vcmp.eq.f32.partialorder %v81, 0.0
    %v182 = vand.u32 %v81, 2147483648
    %v183 = vsel %vm181, %v182, %v180
    %v184 = vrsqrt.pop %v84
    %v185 = vmul.f32 %v184, %v84
    %v186 = vmul.f32 %v185, %v184
    %v187 = vmul.f32 0.5, %v186
    %v188 = vsub.f32 1.5, %v187
    %v189 = vmul.f32 %v184, %v188
    %v190 = vmul.f32 %v84, %v189
    %vm191 = vcmp.eq.f32.partialorder %v84, inf
    %v192 = vsel %vm191, %v84, %v190
    %vm193 = vcmp.eq.f32.partialorder %v84, 0.0
    %v194 = vand.u32 %v84, 2147483648
    %v195 = vsel %vm193, %v194, %v192
    %v196 = vrsqrt.pop %v87
    %v197 = vmul.f32 %v196, %v87
    %v198 = vmul.f32 %v197, %v196
    %v199 = vmul.f32 0.5, %v198
    %v200 = vsub.f32 1.5, %v199
    %v201 = vmul.f32 %v196, %v200
    %v202 = vmul.f32 %v87, %v201
    %vm203 = vcmp.eq.f32.partialorder %v87, inf
    %v204 = vsel %vm203, %v87, %v202
    %vm205 = vcmp.eq.f32.partialorder %v87, 0.0
    %v206 = vand.u32 %v87, 2147483648
    %v207 = vsel %vm205, %v206, %v204
    %v208 = vrsqrt.pop %v90
    %v209 = vmul.f32 %v208, %v90
    %v210 = vmul.f32 %v209, %v208
    %v211 = vmul.f32 0.5, %v210
    %v212 = vsub.f32 1.5, %v211
    %v213 = vmul.f32 %v208, %v212
    %v214 = vmul.f32 %v90, %v213
    %vm215 = vcmp.eq.f32.partialorder %v90, inf
    %v216 = vsel %vm215, %v90, %v214
    %vm217 = vcmp.eq.f32.partialorder %v90, 0.0
    %v218 = vand.u32 %v90, 2147483648
    %v219 = vsel %vm217, %v218, %v216
    %v220 = vrsqrt.pop %v93
    %v221 = vmul.f32 %v220, %v93
    %v222 = vmul.f32 %v221, %v220
    %v223 = vmul.f32 0.5, %v222
    %v224 = vsub.f32 1.5, %v223
    %v225 = vmul.f32 %v220, %v224
    %v226 = vmul.f32 %v93, %v225
    %vm227 = vcmp.eq.f32.partialorder %v93, inf
    %v228 = vsel %vm227, %v93, %v226
    %vm229 = vcmp.eq.f32.partialorder %v93, 0.0
    %v230 = vand.u32 %v93, 2147483648
    %v231 = vsel %vm229, %v230, %v228
    %v232 = vrsqrt.pop %v96
    %v233 = vmul.f32 %v232, %v96
    %v234 = vmul.f32 %v233, %v232
    %v235 = vmul.f32 0.5, %v234
    %v236 = vsub.f32 1.5, %v235
    %v237 = vmul.f32 %v232, %v236
    %v238 = vmul.f32 %v96, %v237
    %vm239 = vcmp.eq.f32.partialorder %v96, inf
    %v240 = vsel %vm239, %v96, %v238
    %vm241 = vcmp.eq.f32.partialorder %v96, 0.0
    %v242 = vand.u32 %v96, 2147483648
    %v243 = vsel %vm241, %v242, %v240
    %v244 = vrsqrt.pop %v99
    %v245 = vmul.f32 %v244, %v99
    %v246 = vmul.f32 %v245, %v244
    %v247 = vmul.f32 0.5, %v246
    %v248 = vsub.f32 1.5, %v247
    %v249 = vmul.f32 %v244, %v248
    %v250 = vmul.f32 %v99, %v249
    %vm251 = vcmp.eq.f32.partialorder %v99, inf
    %v252 = vsel %vm251, %v99, %v250
    %vm253 = vcmp.eq.f32.partialorder %v99, 0.0
    %v254 = vand.u32 %v99, 2147483648
    %v255 = vsel %vm253, %v254, %v252
    %v256 = vrsqrt.pop %v102
    %v257 = vmul.f32 %v256, %v102
    %v258 = vmul.f32 %v257, %v256
    %v259 = vmul.f32 0.5, %v258
    %v260 = vsub.f32 1.5, %v259
    %v261 = vmul.f32 %v256, %v260
    %v262 = vmul.f32 %v102, %v261
    %vm263 = vcmp.eq.f32.partialorder %v102, inf
    %v264 = vsel %vm263, %v102, %v262
    %vm265 = vcmp.eq.f32.partialorder %v102, 0.0
    %v266 = vand.u32 %v102, 2147483648
    %v267 = vsel %vm265, %v266, %v264
    %v268 = vrsqrt.pop %v105
    %v269 = vmul.f32 %v268, %v105
    %v270 = vmul.f32 %v269, %v268
    %v271 = vmul.f32 0.5, %v270
    %v272 = vsub.f32 1.5, %v271
    %v273 = vmul.f32 %v268, %v272
    %v274 = vmul.f32 %v105, %v273
    %vm275 = vcmp.eq.f32.partialorder %v105, inf
    %v276 = vsel %vm275, %v105, %v274
    %vm277 = vcmp.eq.f32.partialorder %v105, 0.0
    %v278 = vand.u32 %v105, 2147483648
    %v279 = vsel %vm277, %v278, %v276
    %v280 = vrsqrt.pop %v108
    %v281 = vmul.f32 %v280, %v108
    %v282 = vmul.f32 %v281, %v280
    %v283 = vmul.f32 0.5, %v282
    %v284 = vsub.f32 1.5, %v283
    %v285 = vmul.f32 %v280, %v284
    %v286 = vmul.f32 %v108, %v285
    %vm287 = vcmp.eq.f32.partialorder %v108, inf
    %v288 = vsel %vm287, %v108, %v286
    %vm289 = vcmp.eq.f32.partialorder %v108, 0.0
    %v290 = vand.u32 %v108, 2147483648
    %v291 = vsel %vm289, %v290, %v288
    %v292 = vrsqrt.pop %v111
    %v293 = vmul.f32 %v292, %v111
    %v294 = vmul.f32 %v293, %v292
    %v295 = vmul.f32 0.5, %v294
    %v296 = vsub.f32 1.5, %v295
    %v297 = vmul.f32 %v292, %v296
    %v298 = vmul.f32 %v111, %v297
    %vm299 = vcmp.eq.f32.partialorder %v111, inf
    %v300 = vsel %vm299, %v111, %v298
    %vm301 = vcmp.eq.f32.partialorder %v111, 0.0
    %v302 = vand.u32 %v111, 2147483648
    %v303 = vsel %vm301, %v302, %v300
    %v304 = vmax.f32 %v123, 1e-06
    %v305 = vmax.f32 %v135, 1e-06
    %v306 = vmax.f32 %v147, 1e-06
    %v307 = vmax.f32 %v159, 1e-06
    %v308 = vmax.f32 %v171, 1e-06
    %v309 = vmax.f32 %v183, 1e-06
    %v310 = vmax.f32 %v195, 1e-06
    %v311 = vmax.f32 %v207, 1e-06
    %v312 = vmax.f32 %v219, 1e-06
    %v313 = vmax.f32 %v231, 1e-06
    %v314 = vmax.f32 %v243, 1e-06
    %v315 = vmax.f32 %v255, 1e-06
    %v316 = vmax.f32 %v267, 1e-06
    %v317 = vmax.f32 %v279, 1e-06
    %v318 = vmax.f32 %v291, 1e-06
    %v319 = vmax.f32 %v303, 1e-06
    %v320 = vrcp.pop %v304
    %v321 = vrcp.pop %v305
    %v322 = vrcp.pop %v306
    %v323 = vrcp.pop %v307
    %v324 = vrcp.pop %v308
    %v325 = vrcp.pop %v309
    %v326 = vrcp.pop %v310
    %v327 = vrcp.pop %v311
    %v328 = vrcp.pop %v312
    %v329 = vrcp.pop %v313
    %v330 = vrcp.pop %v314
    %v331 = vrcp.pop %v315
    %v332 = vrcp.pop %v316
    %v333 = vrcp.pop %v317
    %v334 = vrcp.pop %v318
    %v335 = vrcp.pop %v319
    %v336 = vmul.f32 %v304, %v320
    %v337 = vmul.f32 %v305, %v321
    %v338 = vmul.f32 %v306, %v322
    %v339 = vmul.f32 %v307, %v323
    %v340 = vmul.f32 %v308, %v324
    %v341 = vmul.f32 %v309, %v325
    %v342 = vmul.f32 %v310, %v326
    %v343 = vmul.f32 %v311, %v327
    %v344 = vmul.f32 %v312, %v328
    %v345 = vmul.f32 %v313, %v329
    %v346 = vmul.f32 %v314, %v330
    %v347 = vmul.f32 %v315, %v331
    %v348 = vmul.f32 %v316, %v332
    %v349 = vmul.f32 %v317, %v333
    %v350 = vmul.f32 %v318, %v334
    %v351 = vmul.f32 %v319, %v335
    %v352 = vsub.f32 2.0, %v336
    %v353 = vsub.f32 2.0, %v337
    %v354 = vsub.f32 2.0, %v338
    %v355 = vsub.f32 2.0, %v339
    %v356 = vsub.f32 2.0, %v340
    %v357 = vsub.f32 2.0, %v341
    %v358 = vsub.f32 2.0, %v342
    %v359 = vsub.f32 2.0, %v343
    %v360 = vsub.f32 2.0, %v344
    %v361 = vsub.f32 2.0, %v345
    %v362 = vsub.f32 2.0, %v346
    %v363 = vsub.f32 2.0, %v347
    %v364 = vsub.f32 2.0, %v348
    %v365 = vsub.f32 2.0, %v349
    %v366 = vsub.f32 2.0, %v350
    %v367 = vsub.f32 2.0, %v351
    %v368 = vmul.f32 %v320, %v352
    %v369 = vmul.f32 %v321, %v353
    %v370 = vmul.f32 %v322, %v354
    %v371 = vmul.f32 %v323, %v355
    %v372 = vmul.f32 %v324, %v356
    %v373 = vmul.f32 %v325, %v357
    %v374 = vmul.f32 %v326, %v358
    %v375 = vmul.f32 %v327, %v359
    %v376 = vmul.f32 %v328, %v360
    %v377 = vmul.f32 %v329, %v361
    %v378 = vmul.f32 %v330, %v362
    %v379 = vmul.f32 %v331, %v363
    %v380 = vmul.f32 %v332, %v364
    %v381 = vmul.f32 %v333, %v365
    %v382 = vmul.f32 %v334, %v366
    %v383 = vmul.f32 %v335, %v367
    %v384 = vmul.f32 %v15, %v368
    %v385 = vmul.f32 %v16, %v369
    %v386 = vmul.f32 %v17, %v370
    %v387 = vmul.f32 %v18, %v371
    %v388 = vmul.f32 %v19, %v372
    %v389 = vmul.f32 %v20, %v373
    %v390 = vmul.f32 %v21, %v374
    %v391 = vmul.f32 %v22, %v375
    %v392 = vmul.f32 %v23, %v376
    %v393 = vmul.f32 %v24, %v377
    %v394 = vmul.f32 %v25, %v378
    %v395 = vmul.f32 %v26, %v379
    %v396 = vmul.f32 %v27, %v380
    %v397 = vmul.f32 %v28, %v381
    %v398 = vmul.f32 %v29, %v382
    %v399 = vmul.f32 %v30, %v383
    %v401 = vsel %vm63, %v384, 0
    %v404 = vsel %vm63, %v385, 0
    %v407 = vsel %vm63, %v386, 0
    %v410 = vsel %vm63, %v387, 0
    %v413 = vsel %vm63, %v388, 0
    %v416 = vsel %vm63, %v389, 0
    %v419 = vsel %vm63, %v390, 0
    %v422 = vsel %vm63, %v391, 0
    %v425 = vsel %vm63, %v392, 0
    %v428 = vsel %vm63, %v393, 0
    %v431 = vsel %vm63, %v394, 0
    %v434 = vsel %vm63, %v395, 0
    %v437 = vsel %vm63, %v396, 0
    %v440 = vsel %vm63, %v397, 0
    %v443 = vsel %vm63, %v398, 0
    %v446 = vsel %vm63, %v399, 0
    %v449 = vsel %vm63, %v31, 0
    %v452 = vsel %vm63, %v32, 0
    %v455 = vsel %vm63, %v33, 0
    %v458 = vsel %vm63, %v34, 0
    %v461 = vsel %vm63, %v35, 0
    %v464 = vsel %vm63, %v36, 0
    %v467 = vsel %vm63, %v37, 0
    %v470 = vsel %vm63, %v38, 0
    %v473 = vsel %vm63, %v39, 0
    %v476 = vsel %vm63, %v40, 0
    %v479 = vsel %vm63, %v41, 0
    %v482 = vsel %vm63, %v42, 0
    %v485 = vsel %vm63, %v43, 0
    %v488 = vsel %vm63, %v44, 0
    %v491 = vsel %vm63, %v45, 0
    %v494 = vsel %vm63, %v46, 0
    %496 = vmatpush.xpose.msra.mxu0 %v494
    %497 = vmatpush.xpose.msra.mxu0 %v491
    %498 = vmatpush.xpose.msra.mxu0 %v488
    %499 = vmatpush.xpose.msra.mxu0 %v485
    %500 = vmatpush.xpose.msra.mxu0 %v482
    %501 = vmatpush.xpose.msra.mxu0 %v479
    %502 = vmatpush.xpose.msra.mxu0 %v476
    %503 = vmatpush.xpose.msra.mxu0 %v473
    %504 = vmatpush.xpose.msra.mxu0 %v470
    %505 = vmatpush.xpose.msra.mxu0 %v467
    %506 = vmatpush.xpose.msra.mxu0 %v464
    %507 = vmatpush.xpose.msra.mxu0 %v461
    %508 = vmatpush.xpose.msra.mxu0 %v458
    %509 = vmatpush.xpose.msra.mxu0 %v455
    %510 = vmatpush.xpose.msra.mxu0 %v452
    %511 = vmatpush.xpose.msra.mxu0 %v449
    %512 = vmatmul.f32.gmra.mxu0 %v401
    %v513 = vpop.f32.mrf.mxu0
    %v514 = vadd.f32 0.0, %v513
    %515 = vmatmul.f32.gmra.mxu0 %v404
    %v516 = vpop.f32.mrf.mxu0
    %v517 = vadd.f32 0.0, %v516
    %518 = vmatmul.f32.gmra.mxu0 %v407
    %v519 = vpop.f32.mrf.mxu0
    %v520 = vadd.f32 0.0, %v519
    %521 = vmatmul.f32.gmra.mxu0 %v410
    %v522 = vpop.f32.mrf.mxu0
    %v523 = vadd.f32 0.0, %v522
    %524 = vmatmul.f32.gmra.mxu0 %v413
    %v525 = vpop.f32.mrf.mxu0
    %v526 = vadd.f32 0.0, %v525
    %527 = vmatmul.f32.gmra.mxu0 %v416
    %v528 = vpop.f32.mrf.mxu0
    %v529 = vadd.f32 0.0, %v528
    %530 = vmatmul.f32.gmra.mxu0 %v419
    %v531 = vpop.f32.mrf.mxu0
    %v532 = vadd.f32 0.0, %v531
    %533 = vmatmul.f32.gmra.mxu0 %v422
    %v534 = vpop.f32.mrf.mxu0
    %v535 = vadd.f32 0.0, %v534
    %536 = vmatmul.f32.gmra.mxu0 %v425
    %v537 = vpop.f32.mrf.mxu0
    %v538 = vadd.f32 0.0, %v537
    %539 = vmatmul.f32.gmra.mxu0 %v428
    %v540 = vpop.f32.mrf.mxu0
    %v541 = vadd.f32 0.0, %v540
    %542 = vmatmul.f32.gmra.mxu0 %v431
    %v543 = vpop.f32.mrf.mxu0
    %v544 = vadd.f32 0.0, %v543
    %545 = vmatmul.f32.gmra.mxu0 %v434
    %v546 = vpop.f32.mrf.mxu0
    %v547 = vadd.f32 0.0, %v546
    %548 = vmatmul.f32.gmra.mxu0 %v437
    %v549 = vpop.f32.mrf.mxu0
    %v550 = vadd.f32 0.0, %v549
    %551 = vmatmul.f32.gmra.mxu0 %v440
    %v552 = vpop.f32.mrf.mxu0
    %v553 = vadd.f32 0.0, %v552
    %554 = vmatmul.f32.gmra.mxu0 %v443
    %v555 = vpop.f32.mrf.mxu0
    %v556 = vadd.f32 0.0, %v555
    %557 = vmatmul.f32.gmra.mxu0 %v446
    %v558 = vpop.f32.mrf.mxu0
    %v559 = vadd.f32 0.0, %v558
    %560 = vdwg.mxu0
    %v561 = vmul.f32 %v514, 20.0
    %v562 = vmul.f32 %v517, 20.0
    %v563 = vmul.f32 %v520, 20.0
    %v564 = vmul.f32 %v523, 20.0
    %v565 = vmul.f32 %v526, 20.0
    %v566 = vmul.f32 %v529, 20.0
    %v567 = vmul.f32 %v532, 20.0
    %v568 = vmul.f32 %v535, 20.0
    %v569 = vmul.f32 %v538, 20.0
    %v570 = vmul.f32 %v541, 20.0
    %v571 = vmul.f32 %v544, 20.0
    %v572 = vmul.f32 %v547, 20.0
    %v573 = vmul.f32 %v550, 20.0
    %v574 = vmul.f32 %v553, 20.0
    %v575 = vmul.f32 %v556, 20.0
    %v576 = vmul.f32 %v559, 20.0
    %577 = vmax.xlane.f32.xlu0 %v561
    %v578 = vpop.xlane.xlu0 %577
    %579 = vmax.xlane.f32.xlu0 %v562
    %v580 = vpop.xlane.xlu0 %579
    %581 = vmax.xlane.f32.xlu0 %v563
    %v582 = vpop.xlane.xlu0 %581
    %583 = vmax.xlane.f32.xlu0 %v564
    %v584 = vpop.xlane.xlu0 %583
    %585 = vmax.xlane.f32.xlu0 %v565
    %v586 = vpop.xlane.xlu0 %585
    %587 = vmax.xlane.f32.xlu0 %v566
    %v588 = vpop.xlane.xlu0 %587
    %589 = vmax.xlane.f32.xlu0 %v567
    %v590 = vpop.xlane.xlu0 %589
    %591 = vmax.xlane.f32.xlu0 %v568
    %v592 = vpop.xlane.xlu0 %591
    %593 = vmax.xlane.f32.xlu0 %v569
    %v594 = vpop.xlane.xlu0 %593
    %595 = vmax.xlane.f32.xlu0 %v570
    %v596 = vpop.xlane.xlu0 %595
    %597 = vmax.xlane.f32.xlu0 %v571
    %v598 = vpop.xlane.xlu0 %597
    %599 = vmax.xlane.f32.xlu0 %v572
    %v600 = vpop.xlane.xlu0 %599
    %601 = vmax.xlane.f32.xlu0 %v573
    %v602 = vpop.xlane.xlu0 %601
    %603 = vmax.xlane.f32.xlu0 %v574
    %v604 = vpop.xlane.xlu0 %603
    %605 = vmax.xlane.f32.xlu0 %v575
    %v606 = vpop.xlane.xlu0 %605
    %607 = vmax.xlane.f32.xlu0 %v576
    %v608 = vpop.xlane.xlu0 %607
    %v609 = vsub.f32 %v561, %v578
    %v610 = vsub.f32 %v562, %v580
    %v611 = vsub.f32 %v563, %v582
    %v612 = vsub.f32 %v564, %v584
    %v613 = vsub.f32 %v565, %v586
    %v614 = vsub.f32 %v566, %v588
    %v615 = vsub.f32 %v567, %v590
    %v616 = vsub.f32 %v568, %v592
    %v617 = vsub.f32 %v569, %v594
    %v618 = vsub.f32 %v570, %v596
    %v619 = vsub.f32 %v571, %v598
    %v620 = vsub.f32 %v572, %v600
    %v621 = vsub.f32 %v573, %v602
    %v622 = vsub.f32 %v574, %v604
    %v623 = vsub.f32 %v575, %v606
    %v624 = vsub.f32 %v576, %v608
    %v625 = vmul.f32 %v609, 1.442695
    %v626 = vpow.pop %v625
    %v627 = vmul.f32 %v610, 1.442695
    %v628 = vpow.pop %v627
    %v629 = vmul.f32 %v611, 1.442695
    %v630 = vpow.pop %v629
    %v631 = vmul.f32 %v612, 1.442695
    %v632 = vpow.pop %v631
    %v633 = vmul.f32 %v613, 1.442695
    %v634 = vpow.pop %v633
    %v635 = vmul.f32 %v614, 1.442695
    %v636 = vpow.pop %v635
    %v637 = vmul.f32 %v615, 1.442695
    %v638 = vpow.pop %v637
    %v639 = vmul.f32 %v616, 1.442695
    %v640 = vpow.pop %v639
    %v641 = vmul.f32 %v617, 1.442695
    %v642 = vpow.pop %v641
    %v643 = vmul.f32 %v618, 1.442695
    %v644 = vpow.pop %v643
    %v645 = vmul.f32 %v619, 1.442695
    %v646 = vpow.pop %v645
    %v647 = vmul.f32 %v620, 1.442695
    %v648 = vpow.pop %v647
    %v649 = vmul.f32 %v621, 1.442695
    %v650 = vpow.pop %v649
    %v651 = vmul.f32 %v622, 1.442695
    %v652 = vpow.pop %v651
    %v653 = vmul.f32 %v623, 1.442695
    %v654 = vpow.pop %v653
    %v655 = vmul.f32 %v624, 1.442695
    %v656 = vpow.pop %v655
    %657 = vadd.xlane.f32.xlu0 %v626
    %v658 = vpop.xlane.xlu0 %657
    %659 = vadd.xlane.f32.xlu0 %v628
    %v660 = vpop.xlane.xlu0 %659
    %661 = vadd.xlane.f32.xlu0 %v630
    %v662 = vpop.xlane.xlu0 %661
    %663 = vadd.xlane.f32.xlu0 %v632
    %v664 = vpop.xlane.xlu0 %663
    %665 = vadd.xlane.f32.xlu0 %v634
    %v666 = vpop.xlane.xlu0 %665
    %667 = vadd.xlane.f32.xlu0 %v636
    %v668 = vpop.xlane.xlu0 %667
    %669 = vadd.xlane.f32.xlu0 %v638
    %v670 = vpop.xlane.xlu0 %669
    %671 = vadd.xlane.f32.xlu0 %v640
    %v672 = vpop.xlane.xlu0 %671
    %673 = vadd.xlane.f32.xlu0 %v642
    %v674 = vpop.xlane.xlu0 %673
    %675 = vadd.xlane.f32.xlu0 %v644
    %v676 = vpop.xlane.xlu0 %675
    %677 = vadd.xlane.f32.xlu0 %v646
    %v678 = vpop.xlane.xlu0 %677
    %679 = vadd.xlane.f32.xlu0 %v648
    %v680 = vpop.xlane.xlu0 %679
    %681 = vadd.xlane.f32.xlu0 %v650
    %v682 = vpop.xlane.xlu0 %681
    %683 = vadd.xlane.f32.xlu0 %v652
    %v684 = vpop.xlane.xlu0 %683
    %685 = vadd.xlane.f32.xlu0 %v654
    %v686 = vpop.xlane.xlu0 %685
    %687 = vadd.xlane.f32.xlu0 %v656
    %v688 = vpop.xlane.xlu0 %687
    %v689 = vrcp.pop %v658
    %v690 = vrcp.pop %v660
    %v691 = vrcp.pop %v662
    %v692 = vrcp.pop %v664
    %v693 = vrcp.pop %v666
    %v694 = vrcp.pop %v668
    %v695 = vrcp.pop %v670
    %v696 = vrcp.pop %v672
    %v697 = vrcp.pop %v674
    %v698 = vrcp.pop %v676
    %v699 = vrcp.pop %v678
    %v700 = vrcp.pop %v680
    %v701 = vrcp.pop %v682
    %v702 = vrcp.pop %v684
    %v703 = vrcp.pop %v686
    %v704 = vrcp.pop %v688
    %v705 = vmul.f32 %v658, %v689
    %v706 = vmul.f32 %v660, %v690
    %v707 = vmul.f32 %v662, %v691
    %v708 = vmul.f32 %v664, %v692
    %v709 = vmul.f32 %v666, %v693
    %v710 = vmul.f32 %v668, %v694
    %v711 = vmul.f32 %v670, %v695
    %v712 = vmul.f32 %v672, %v696
    %v713 = vmul.f32 %v674, %v697
    %v714 = vmul.f32 %v676, %v698
    %v715 = vmul.f32 %v678, %v699
    %v716 = vmul.f32 %v680, %v700
    %v717 = vmul.f32 %v682, %v701
    %v718 = vmul.f32 %v684, %v702
    %v719 = vmul.f32 %v686, %v703
    %v720 = vmul.f32 %v688, %v704
    %v721 = vsub.f32 2.0, %v705
    %v722 = vsub.f32 2.0, %v706
    %v723 = vsub.f32 2.0, %v707
    %v724 = vsub.f32 2.0, %v708
    %v725 = vsub.f32 2.0, %v709
    %v726 = vsub.f32 2.0, %v710
    %v727 = vsub.f32 2.0, %v711
    %v728 = vsub.f32 2.0, %v712
    %v729 = vsub.f32 2.0, %v713
    %v730 = vsub.f32 2.0, %v714
    %v731 = vsub.f32 2.0, %v715
    %v732 = vsub.f32 2.0, %v716
    %v733 = vsub.f32 2.0, %v717
    %v734 = vsub.f32 2.0, %v718
    %v735 = vsub.f32 2.0, %v719
    %v736 = vsub.f32 2.0, %v720
    %v737 = vmul.f32 %v689, %v721
    %v738 = vmul.f32 %v690, %v722
    %v739 = vmul.f32 %v691, %v723
    %v740 = vmul.f32 %v692, %v724
    %v741 = vmul.f32 %v693, %v725
    %v742 = vmul.f32 %v694, %v726
    %v743 = vmul.f32 %v695, %v727
    %v744 = vmul.f32 %v696, %v728
    %v745 = vmul.f32 %v697, %v729
    %v746 = vmul.f32 %v698, %v730
    %v747 = vmul.f32 %v699, %v731
    %v748 = vmul.f32 %v700, %v732
    %v749 = vmul.f32 %v701, %v733
    %v750 = vmul.f32 %v702, %v734
    %v751 = vmul.f32 %v703, %v735
    %v752 = vmul.f32 %v704, %v736
    %v753 = vmul.f32 %v626, %v737
    %v754 = vmul.f32 %v628, %v738
    %v755 = vmul.f32 %v630, %v739
    %v756 = vmul.f32 %v632, %v740
    %v757 = vmul.f32 %v634, %v741
    %v758 = vmul.f32 %v636, %v742
    %v759 = vmul.f32 %v638, %v743
    %v760 = vmul.f32 %v640, %v744
    %v761 = vmul.f32 %v642, %v745
    %v762 = vmul.f32 %v644, %v746
    %v763 = vmul.f32 %v646, %v747
    %v764 = vmul.f32 %v648, %v748
    %v765 = vmul.f32 %v650, %v749
    %v766 = vmul.f32 %v652, %v750
    %v767 = vmul.f32 %v654, %v751
    %v768 = vmul.f32 %v656, %v752
    %v769 = vmax.f32 %v561, %v565
    %v770 = vmax.f32 %v562, %v566
    %v771 = vmax.f32 %v563, %v567
    %v772 = vmax.f32 %v564, %v568
    %v773 = vmax.f32 %v769, %v770
    %v774 = vmax.f32 %v771, %v772
    %v775 = vmax.f32 %v773, %v774
    %v776 = vrot.slane %v775, 4
    %v777 = vmax.f32 %v775, %v776
    %v778 = vrot.slane %v777, 2
    %v779 = vmax.f32 %v777, %v778
    %v780 = vrot.slane %v779, 1
    %v781 = vmax.f32 %v779, %v780
    %v782 = vsub.f32 %v561, %v781
    %v783 = vsub.f32 %v562, %v781
    %v784 = vsub.f32 %v563, %v781
    %v785 = vsub.f32 %v564, %v781
    %v786 = vsub.f32 %v565, %v781
    %v787 = vsub.f32 %v566, %v781
    %v788 = vsub.f32 %v567, %v781
    %v789 = vsub.f32 %v568, %v781
    %v790 = vmul.f32 %v782, 1.442695
    %v791 = vpow.pop %v790
    %v792 = vmul.f32 %v783, 1.442695
    %v793 = vpow.pop %v792
    %v794 = vmul.f32 %v784, 1.442695
    %v795 = vpow.pop %v794
    %v796 = vmul.f32 %v785, 1.442695
    %v797 = vpow.pop %v796
    %v798 = vmul.f32 %v786, 1.442695
    %v799 = vpow.pop %v798
    %v800 = vmul.f32 %v787, 1.442695
    %v801 = vpow.pop %v800
    %v802 = vmul.f32 %v788, 1.442695
    %v803 = vpow.pop %v802
    %v804 = vmul.f32 %v789, 1.442695
    %v805 = vpow.pop %v804
    %v806 = vadd.f32 %v791, %v793
    %v807 = vadd.f32 %v806, %v795
    %v808 = vadd.f32 %v807, %v797
    %v809 = vadd.f32 %v808, %v799
    %v810 = vadd.f32 %v809, %v801
    %v811 = vadd.f32 %v810, %v803
    %v812 = vadd.f32 %v811, %v805
    %v813 = vrot.slane %v812, 4
    %v814 = vadd.f32 %v812, %v813
    %v815 = vrot.slane %v814, 2
    %v816 = vadd.f32 %v814, %v815
    %v817 = vrot.slane %v816, 1
    %v818 = vadd.f32 %v816, %v817
    %v819 = vrcp.pop %v818
    %v820 = vmul.f32 %v818, %v819
    %v821 = vsub.f32 2.0, %v820
    %v822 = vmul.f32 %v819, %v821
    %v823 = vmul.f32 %v791, %v822
    %v824 = vmul.f32 %v793, %v822
    %v825 = vmul.f32 %v795, %v822
    %v826 = vmul.f32 %v797, %v822
    %v827 = vmul.f32 %v799, %v822
    %v828 = vmul.f32 %v801, %v822
    %v829 = vmul.f32 %v803, %v822
    %v830 = vmul.f32 %v805, %v822
    %831 = vmatpush.xpose.msra.mxu0 0.0
    %832 = vmatpush.xpose.msra.mxu0 0.0
    %833 = vmatpush.xpose.msra.mxu0 0.0
    %834 = vmatpush.xpose.msra.mxu0 0.0
    %835 = vmatpush.xpose.msra.mxu0 0.0
    %836 = vmatpush.xpose.msra.mxu0 0.0
    %837 = vmatpush.xpose.msra.mxu0 0.0
    %838 = vmatpush.xpose.msra.mxu0 0.0
    %839 = vmatpush.xpose.msra.mxu0 %v830
    %840 = vmatpush.xpose.msra.mxu0 %v829
    %841 = vmatpush.xpose.msra.mxu0 %v828
    %842 = vmatpush.xpose.msra.mxu0 %v827
    %843 = vmatpush.xpose.msra.mxu0 %v826
    %844 = vmatpush.xpose.msra.mxu0 %v825
    %845 = vmatpush.xpose.msra.mxu0 %v824
    %846 = vmatpush.xpose.msra.mxu0 %v823
    %847 = vmatmul.f32.gmra.mxu0 %v753
    %v848 = vpop.f32.mrf.mxu0
    %v849 = vadd.f32 0.0, %v848
    %850 = vmatmul.f32.gmra.mxu0 %v754
    %v851 = vpop.f32.mrf.mxu0
    %v852 = vadd.f32 0.0, %v851
    %853 = vmatmul.f32.gmra.mxu0 %v755
    %v854 = vpop.f32.mrf.mxu0
    %v855 = vadd.f32 0.0, %v854
    %856 = vmatmul.f32.gmra.mxu0 %v756
    %v857 = vpop.f32.mrf.mxu0
    %v858 = vadd.f32 0.0, %v857
    %859 = vmatmul.f32.gmra.mxu0 %v757
    %v860 = vpop.f32.mrf.mxu0
    %v861 = vadd.f32 0.0, %v860
    %862 = vmatmul.f32.gmra.mxu0 %v758
    %v863 = vpop.f32.mrf.mxu0
    %v864 = vadd.f32 0.0, %v863
    %865 = vmatmul.f32.gmra.mxu0 %v759
    %v866 = vpop.f32.mrf.mxu0
    %v867 = vadd.f32 0.0, %v866
    %868 = vmatmul.f32.gmra.mxu0 %v760
    %v869 = vpop.f32.mrf.mxu0
    %v870 = vadd.f32 0.0, %v869
    %871 = vdwg.mxu0
    %v872 = vld [vmem:[%s2] sm:$0xff]
    %v873 = vld [vmem:[%s2 + $0x8] sm:$0xff]
    %v874 = vld [vmem:[%s2 + $0x10] sm:$0xff]
    %v875 = vld [vmem:[%s2 + $0x18] sm:$0xff]
    %v876 = vld [vmem:[%s2 + $0x20] sm:$0xff]
    %v877 = vld [vmem:[%s2 + $0x28] sm:$0xff]
    %v878 = vld [vmem:[%s2 + $0x30] sm:$0xff]
    %v879 = vld [vmem:[%s2 + $0x38] sm:$0xff]
    %v880 = vmul.f32 %v872, %v849
    %v881 = vmul.f32 %v873, %v852
    %v882 = vmul.f32 %v874, %v855
    %v883 = vmul.f32 %v875, %v858
    %v884 = vmul.f32 %v876, %v861
    %v885 = vmul.f32 %v877, %v864
    %v886 = vmul.f32 %v878, %v867
    %v887 = vmul.f32 %v879, %v870
    %v888 = vmul.f32 %v880, %v880
    %v889 = vmul.f32 %v881, %v881
    %v890 = vmul.f32 %v882, %v882
    %v891 = vmul.f32 %v883, %v883
    %v892 = vmul.f32 %v884, %v884
    %v893 = vmul.f32 %v885, %v885
    %v894 = vmul.f32 %v886, %v886
    %v895 = vmul.f32 %v887, %v887
    %vm896 = vcmask 523264
    %v897 = vsel %vm896, %v888, 0.0
    %v898 = vsel %vm896, %v889, 0.0
    %v899 = vadd.f32 %v897, %v898
    %v900 = vsel %vm896, %v890, 0.0
    %v901 = vadd.f32 %v899, %v900
    %v902 = vsel %vm896, %v891, 0.0
    %v903 = vadd.f32 %v901, %v902
    %v904 = vsel %vm896, %v892, 0.0
    %v905 = vadd.f32 %v903, %v904
    %v906 = vsel %vm896, %v893, 0.0
    %v907 = vadd.f32 %v905, %v906
    %v908 = vsel %vm896, %v894, 0.0
    %v909 = vadd.f32 %v907, %v908
    %v910 = vsel %vm896, %v895, 0.0
    %v911 = vadd.f32 %v909, %v910
    %912 = vadd.xlane.f32.xlu0 %v911
    %v913 = vpop.xlane.xlu0 %912
    %v914 = vrot.slane %v913, 4
    %v915 = vadd.f32 %v913, %v914
    %v916 = vrot.slane %v915, 2
    %v917 = vadd.f32 %v915, %v916
    %v918 = vrot.slane %v917, 1
    %v919 = vadd.f32 %v917, %v918
    %s920 = vtos %v919
    %v921 = vstv %s920
    %v922 = vrsqrt.pop %v921
    %v923 = vmul.f32 %v922, %v921
    %v924 = vmul.f32 %v923, %v922
    %v925 = vmul.f32 0.5, %v924
    %v926 = vsub.f32 1.5, %v925
    %v927 = vmul.f32 %v922, %v926
    %v928 = vmul.f32 %v921, %v927
    %vm929 = vcmp.eq.f32.partialorder %v921, inf
    %v930 = vsel %vm929, %v921, %v928
    %vm931 = vcmp.eq.f32.partialorder %v921, 0.0
    %v932 = vand.u32 %v921, 2147483648
    %v933 = vsel %vm931, %v932, %v930
    %s934 = vtos %v933
    %s935 = sadd.f32 %s934, 0.0
    %v936 = vmax.f32 %v569, %v573
    %v937 = vmax.f32 %v570, %v574
    %v938 = vmax.f32 %v571, %v575
    %v939 = vmax.f32 %v572, %v576
    %v940 = vmax.f32 %v936, %v937
    %v941 = vmax.f32 %v938, %v939
    %v942 = vmax.f32 %v940, %v941
    %v943 = vrot.slane %v942, 4
    %v944 = vmax.f32 %v942, %v943
    %v945 = vrot.slane %v944, 2
    %v946 = vmax.f32 %v944, %v945
    %v947 = vrot.slane %v946, 1
    %v948 = vmax.f32 %v946, %v947
    %v949 = vsub.f32 %v569, %v948
    %v950 = vsub.f32 %v570, %v948
    %v951 = vsub.f32 %v571, %v948
    %v952 = vsub.f32 %v572, %v948
    %v953 = vsub.f32 %v573, %v948
    %v954 = vsub.f32 %v574, %v948
    %v955 = vsub.f32 %v575, %v948
    %v956 = vsub.f32 %v576, %v948
    %v957 = vmul.f32 %v949, 1.442695
    %v958 = vpow.pop %v957
    %v959 = vmul.f32 %v950, 1.442695
    %v960 = vpow.pop %v959
    %v961 = vmul.f32 %v951, 1.442695
    %v962 = vpow.pop %v961
    %v963 = vmul.f32 %v952, 1.442695
    %v964 = vpow.pop %v963
    %v965 = vmul.f32 %v953, 1.442695
    %v966 = vpow.pop %v965
    %v967 = vmul.f32 %v954, 1.442695
    %v968 = vpow.pop %v967
    %v969 = vmul.f32 %v955, 1.442695
    %v970 = vpow.pop %v969
    %v971 = vmul.f32 %v956, 1.442695
    %v972 = vpow.pop %v971
    %v973 = vadd.f32 %v958, %v960
    %v974 = vadd.f32 %v973, %v962
    %v975 = vadd.f32 %v974, %v964
    %v976 = vadd.f32 %v975, %v966
    %v977 = vadd.f32 %v976, %v968
    %v978 = vadd.f32 %v977, %v970
    %v979 = vadd.f32 %v978, %v972
    %v980 = vrot.slane %v979, 4
    %v981 = vadd.f32 %v979, %v980
    %v982 = vrot.slane %v981, 2
    %v983 = vadd.f32 %v981, %v982
    %v984 = vrot.slane %v983, 1
    %v985 = vadd.f32 %v983, %v984
    %v986 = vrcp.pop %v985
    %v987 = vmul.f32 %v985, %v986
    %v988 = vsub.f32 2.0, %v987
    %v989 = vmul.f32 %v986, %v988
    %v990 = vmul.f32 %v958, %v989
    %v991 = vmul.f32 %v960, %v989
    %v992 = vmul.f32 %v962, %v989
    %v993 = vmul.f32 %v964, %v989
    %v994 = vmul.f32 %v966, %v989
    %v995 = vmul.f32 %v968, %v989
    %v996 = vmul.f32 %v970, %v989
    %v997 = vmul.f32 %v972, %v989
    %998 = vmatpush.xpose.msra.mxu0 0.0
    %999 = vmatpush.xpose.msra.mxu0 0.0
    %1000 = vmatpush.xpose.msra.mxu0 0.0
    %1001 = vmatpush.xpose.msra.mxu0 0.0
    %1002 = vmatpush.xpose.msra.mxu0 0.0
    %1003 = vmatpush.xpose.msra.mxu0 0.0
    %1004 = vmatpush.xpose.msra.mxu0 0.0
    %1005 = vmatpush.xpose.msra.mxu0 0.0
    %1006 = vmatpush.xpose.msra.mxu0 %v997
    %1007 = vmatpush.xpose.msra.mxu0 %v996
    %1008 = vmatpush.xpose.msra.mxu0 %v995
    %1009 = vmatpush.xpose.msra.mxu0 %v994
    %1010 = vmatpush.xpose.msra.mxu0 %v993
    %1011 = vmatpush.xpose.msra.mxu0 %v992
    %1012 = vmatpush.xpose.msra.mxu0 %v991
    %1013 = vmatpush.xpose.msra.mxu0 %v990
    %1014 = vmatmul.f32.gmra.mxu0 %v761
    %v1015 = vpop.f32.mrf.mxu0
    %v1016 = vadd.f32 0.0, %v1015
    %1017 = vmatmul.f32.gmra.mxu0 %v762
    %v1018 = vpop.f32.mrf.mxu0
    %v1019 = vadd.f32 0.0, %v1018
    %1020 = vmatmul.f32.gmra.mxu0 %v763
    %v1021 = vpop.f32.mrf.mxu0
    %v1022 = vadd.f32 0.0, %v1021
    %1023 = vmatmul.f32.gmra.mxu0 %v764
    %v1024 = vpop.f32.mrf.mxu0
    %v1025 = vadd.f32 0.0, %v1024
    %1026 = vmatmul.f32.gmra.mxu0 %v765
    %v1027 = vpop.f32.mrf.mxu0
    %v1028 = vadd.f32 0.0, %v1027
    %1029 = vmatmul.f32.gmra.mxu0 %v766
    %v1030 = vpop.f32.mrf.mxu0
    %v1031 = vadd.f32 0.0, %v1030
    %1032 = vmatmul.f32.gmra.mxu0 %v767
    %v1033 = vpop.f32.mrf.mxu0
    %v1034 = vadd.f32 0.0, %v1033
    %1035 = vmatmul.f32.gmra.mxu0 %v768
    %v1036 = vpop.f32.mrf.mxu0
    %v1037 = vadd.f32 0.0, %v1036
    %1038 = vdwg.mxu0
    %s1039 = scalar_lea.vmem %s2, 64
    %v1040 = vld [vmem:[%s1039] sm:$0xff]
    %v1041 = vld [vmem:[%s1039 + $0x8] sm:$0xff]
    %v1042 = vld [vmem:[%s1039 + $0x10] sm:$0xff]
    %v1043 = vld [vmem:[%s1039 + $0x18] sm:$0xff]
    %v1044 = vld [vmem:[%s1039 + $0x20] sm:$0xff]
    %v1045 = vld [vmem:[%s1039 + $0x28] sm:$0xff]
    %v1046 = vld [vmem:[%s1039 + $0x30] sm:$0xff]
    %v1047 = vld [vmem:[%s1039 + $0x38] sm:$0xff]
    %v1048 = vmul.f32 %v1040, %v1016
    %v1049 = vmul.f32 %v1041, %v1019
    %v1050 = vmul.f32 %v1042, %v1022
    %v1051 = vmul.f32 %v1043, %v1025
    %v1052 = vmul.f32 %v1044, %v1028
    %v1053 = vmul.f32 %v1045, %v1031
    %v1054 = vmul.f32 %v1046, %v1034
    %v1055 = vmul.f32 %v1047, %v1037
    %v1056 = vmul.f32 %v1048, %v1048
    %v1057 = vmul.f32 %v1049, %v1049
    %v1058 = vmul.f32 %v1050, %v1050
    %v1059 = vmul.f32 %v1051, %v1051
    %v1060 = vmul.f32 %v1052, %v1052
    %v1061 = vmul.f32 %v1053, %v1053
    %v1062 = vmul.f32 %v1054, %v1054
    %v1063 = vmul.f32 %v1055, %v1055
    %v1064 = vsel %vm896, %v1056, 0.0
    %v1065 = vsel %vm896, %v1057, 0.0
    %v1066 = vadd.f32 %v1064, %v1065
    %v1067 = vsel %vm896, %v1058, 0.0
    %v1068 = vadd.f32 %v1066, %v1067
    %v1069 = vsel %vm896, %v1059, 0.0
    %v1070 = vadd.f32 %v1068, %v1069
    %v1071 = vsel %vm896, %v1060, 0.0
    %v1072 = vadd.f32 %v1070, %v1071
    %v1073 = vsel %vm896, %v1061, 0.0
    %v1074 = vadd.f32 %v1072, %v1073
    %v1075 = vsel %vm896, %v1062, 0.0
    %v1076 = vadd.f32 %v1074, %v1075
    %v1077 = vsel %vm896, %v1063, 0.0
    %v1078 = vadd.f32 %v1076, %v1077
    %1079 = vadd.xlane.f32.xlu0 %v1078
    %v1080 = vpop.xlane.xlu0 %1079
    %v1081 = vrot.slane %v1080, 4
    %v1082 = vadd.f32 %v1080, %v1081
    %v1083 = vrot.slane %v1082, 2
    %v1084 = vadd.f32 %v1082, %v1083
    %v1085 = vrot.slane %v1084, 1
    %v1086 = vadd.f32 %v1084, %v1085
    %s1087 = vtos %v1086
    %v1088 = vstv %s1087
    %v1089 = vrsqrt.pop %v1088
    %v1090 = vmul.f32 %v1089, %v1088
    %v1091 = vmul.f32 %v1090, %v1089
    %v1092 = vmul.f32 0.5, %v1091
    %v1093 = vsub.f32 1.5, %v1092
    %v1094 = vmul.f32 %v1089, %v1093
    %v1095 = vmul.f32 %v1088, %v1094
    %vm1096 = vcmp.eq.f32.partialorder %v1088, inf
    %v1097 = vsel %vm1096, %v1088, %v1095
    %vm1098 = vcmp.eq.f32.partialorder %v1088, 0.0
    %v1099 = vand.u32 %v1088, 2147483648
    %v1100 = vsel %vm1098, %v1099, %v1097
    %s1101 = vtos %v1100
    %s1102 = sadd.f32 %s935, %s1101
    %s1103 = smul.f32 %s1102, 0.5
    %s1104 = scalar_lea.smem [#allocation2], 0
    %1105 = sst [smem:[%s1104]] %s1103
    // Predicated region
    $region14: #{tpu_custom_call.1} parent=1 // pred_check
      _
    $region15: #{tpu_custom_call.1} parent=1 // pred_check_branch
      %1107 = sbr.rel (0) target = $region17
    $region16: #{tpu_custom_call.1} parent=1 // pred_region
      %1109 = vsyncadd [#allocation3], 0
      %s1111 = sshll.u32 %s3, 4
      %s1112 = int_to_ptr.hbm [resolvable:$true] %s1111
      %1114 = dma.smem_to_hbm [#allocation2], 16, %s1112, [#allocation3]
    $region17: #{tpu_custom_call.1} parent=1 // pred_fallthru
      _
    // Predicated region
    $region18: #{tpu_custom_call.1} parent=1 // pred_check
      _
    $region19: #{tpu_custom_call.1} parent=1 // pred_check_branch
      %1116 = sbr.rel (0) target = $region21
    $region20: #{tpu_custom_call.1} parent=1 // pred_region
      %1118 = dma.done [#allocation3], 16
    $region21: #{tpu_custom_call.1} parent=1 // pred_fallthru
      _
    %1119 = sfence
    %1120 = vsyncpa [#allocation3], 1

</llo_original>
